<compile_context>
chip_gen: v7x
topology: tpu7x:2x2x1
jax: 0.10.0
libtpu: 0.0.40
codegen_flags: <defaults>
</compile_context>

<pallas_src>
import functools

import jax
import jax.numpy as jnp
from jax import lax
from jax.experimental import pallas as pl
from jax.experimental.pallas import tpu as pltpu


# ---------------------------------------------------------------------------
# Generation-aware tiling config
# ---------------------------------------------------------------------------
_LANE = 128


@functools.lru_cache(maxsize=1)
def _chip_config():
    """n_splits = TensorCores used via the 'parallel' axis; budgets per generation."""
    kind = ""
    try:
        dev = jax.devices()[0]
        if dev.platform == "tpu":
            kind = (getattr(dev, "device_kind", "") or "").lower()
    except Exception:  # defensive: fall back to the single-core config
        pass
    if "v7" in kind:
        # v7x: 2 TCs/chip, only 64 MiB physical VMEM, ~3.2 TB/s HBM per TC.
        return {"n_splits": 2, "budget": 16 << 20, "vmem_limit": 48 * 1024 * 1024}
    # v5e / v6e (and unknown): 1 TC, 128 MiB physical VMEM.
    return {"n_splits": 1, "budget": 12 << 20, "vmem_limit": 64 * 1024 * 1024}


def _pick_tk(per_split, c, dtype_bytes, budget_bytes):
    """Largest TK (multiple of 128) that divides per_split and fits the VMEM budget."""
    cap = max(_LANE, (budget_bytes // max(c * dtype_bytes, 1)) // _LANE * _LANE)
    tk = min(per_split, cap)
    tk = max(_LANE, (tk // _LANE) * _LANE)
    while per_split % tk != 0:
        tk -= _LANE
    return tk


def _pad_flat(flat, n_splits):
    """Zero-pad the WH axis up to a multiple of 128 * n_splits (exact for the Gram)."""
    _, wh = flat.shape
    align = _LANE * n_splits
    pad = (-wh) % align
    if pad:
        flat = jnp.pad(flat, ((0, 0), (0, pad)))
    return flat


def _gram_dot(x):
    """(C, TK) x (C, TK) -> (C, C), contracting both operands on the lane axis."""
    return lax.dot_general(
        x, x,
        dimension_numbers=(((1,), (1,)), ((), ())),
        preferred_element_type=jnp.float32,
    )


# ---------------------------------------------------------------------------
# Kernels
# ---------------------------------------------------------------------------
def _gram_partial_kernel(flat_ref, gram_ref, *, inv_cwh):
    """One (C, C) partial Gram per 'parallel' split, accumulated over WH tiles."""
    k = pl.program_id(1)

    @pl.when(k == 0)
    def _init():
        gram_ref[...] = jnp.zeros_like(gram_ref)

    gram_ref[...] += _gram_dot(flat_ref[...])

    @pl.when(k == pl.num_programs(1) - 1)
    def _finalize():
        gram_ref[...] = gram_ref[...] * inv_cwh


def _style_loss_kernel(style_gram_ref, flat_ref, loss_ref, acc_ref,
                       *, inv_cwh, inv_cc):
    """Fused single-core path: loss = mean((style_gram - gram(x))**2)."""
    k = pl.program_id(0)

    @pl.when(k == 0)
    def _init():
        acc_ref[...] = jnp.zeros_like(acc_ref)

    acc_ref[...] += _gram_dot(flat_ref[...])

    @pl.when(k == pl.num_programs(0) - 1)
    def _finalize():
        gram = acc_ref[...] * inv_cwh
        diff = style_gram_ref[...].astype(jnp.float32) - gram
        loss_ref[0, 0] = jnp.sum(diff * diff) * inv_cc


# ---------------------------------------------------------------------------
# Wrappers (pallas_call glue)
# ---------------------------------------------------------------------------
def gram_matrix(flat, *, tk=None):
    """flat: (C, WH) -> (C, C) Gram matrix / (C*WH)."""
    c, wh_true = flat.shape
    cfg = _chip_config()
    n_splits = cfg["n_splits"]
    flat_p = _pad_flat(flat, n_splits)
    wh_pad = flat_p.shape[1]
    per_split = wh_pad // n_splits
    dtype_bytes = jnp.dtype(flat.dtype).itemsize
    if tk is None:
        tk = _pick_tk(per_split, c, dtype_bytes, cfg["budget"])
    tk = min(tk, per_split)
    assert per_split % tk == 0
    steps = per_split // tk

    kernel = functools.partial(_gram_partial_kernel,
                               inv_cwh=1.0 / float(c * wh_true))
    partials = pl.pallas_call(
        kernel,
        out_shape=jax.ShapeDtypeStruct((n_splits, c, c), jnp.float32),
        grid_spec=pltpu.PrefetchScalarGridSpec(
            num_scalar_prefetch=0,
            grid=(n_splits, steps),
            in_specs=[pl.BlockSpec((c, tk), lambda s, k: (0, s * steps + k))],
            out_specs=pl.BlockSpec((None, c, c), lambda s, k: (s, 0, 0)),
        ),
        compiler_params=pltpu.CompilerParams(
            dimension_semantics=("parallel", "arbitrary"),
            vmem_limit_bytes=cfg["vmem_limit"],
        ),
        cost_estimate=pl.CostEstimate(
            flops=2 * c * c * wh_pad,
            transcendentals=0,
            bytes_accessed=c * wh_pad * dtype_bytes + n_splits * c * c * 4,
        ),
    )(flat_p)
    if n_splits == 1:
        return partials[0]
    return jnp.sum(partials, axis=0)  # tiny (C, C) combine epilogue


def style_mse_loss(style_gram, flat, *, tk=None):
    """style_gram: (C, C) f32, flat: (C, WH) -> scalar MSE loss."""
    c, wh_true = flat.shape
    cfg = _chip_config()
    n_splits = cfg["n_splits"]

    if n_splits > 1:
        # Megacore (v7x) path: per-core partial Grams in the Pallas kernel,
        # tiny (C, C) combine + MSE epilogue outside the kernel.
        gram = gram_matrix(flat, tk=tk)
        diff = style_gram.astype(jnp.float32) - gram
        return jnp.mean(diff * diff)

    flat_p = _pad_flat(flat, n_splits)
    wh_pad = flat_p.shape[1]
    dtype_bytes = jnp.dtype(flat.dtype).itemsize
    if tk is None:
        tk = _pick_tk(wh_pad, c, dtype_bytes, cfg["budget"])
    tk = min(tk, wh_pad)
    assert wh_pad % tk == 0
    steps = wh_pad // tk

    kernel = functools.partial(
        _style_loss_kernel,
        inv_cwh=1.0 / float(c * wh_true),
        inv_cc=1.0 / float(c * c),
    )
    loss = pl.pallas_call(
        kernel,
        out_shape=jax.ShapeDtypeStruct((1, 1), jnp.float32),
        grid_spec=pltpu.PrefetchScalarGridSpec(
            num_scalar_prefetch=0,
            grid=(steps,),
            in_specs=[
                pl.BlockSpec((c, c), lambda k: (0, 0)),
                pl.BlockSpec((c, tk), lambda k: (0, k)),
            ],
            out_specs=pl.BlockSpec((1, 1), lambda k: (0, 0)),
            scratch_shapes=[pltpu.VMEM((c, c), jnp.float32)],
        ),
        compiler_params=pltpu.CompilerParams(
            dimension_semantics=("arbitrary",),
            vmem_limit_bytes=cfg["vmem_limit"],
        ),
        cost_estimate=pl.CostEstimate(
            flops=2 * c * c * wh_pad + 3 * c * c,
            transcendentals=0,
            bytes_accessed=c * wh_pad * dtype_bytes + 2 * c * c * 4 + 4,
        ),
    )(style_gram, flat_p)
    return loss[0, 0]


class StyleLossProbe:
    """JAX/Pallas port of the PyTorch StyleLossProbe module.

    Note: like the PyTorch original, __call__ mutates self.loss; this Python-level
    side effect is NOT jit/trace-safe if the probe is called inside a larger jitted
    forward pass.  Feeding bf16 activations roughly halves the HBM traffic of this
    bandwidth-bound probe (f32 accumulation inside the kernel keeps the loss sound).
    """

    def __init__(self, style):
        # style: NCHW with N == 1 (required by the original view(c, w*h)).
        _, c, w, h = style.shape
        flat = jnp.reshape(lax.stop_gradient(style), (c, w * h))
        self.style = style
        self.style_gram_matrix = gram_matrix(flat)
        self.loss = -1.0

    def __call__(self, x):
        _, c, w, h = x.shape
        flat = jnp.reshape(x, (c, w * h))
        self.loss = style_mse_loss(self.style_gram_matrix, flat)
        return x  # forward returns its input unchanged


# ---------------------------------------------------------------------------
# Pure-JAX reference for sanity checks
# ---------------------------------------------------------------------------
def _gram_ref(x):
    _, c, w, h = x.shape
    flat = jnp.reshape(x, (c, w * h)).astype(jnp.float32)
    return flat @ flat.T / (c * w * h)


if __name__ == "__main__":
    key = jax.random.PRNGKey(0)
    k_style, k_x, k_style2, k_x2, k_style3, k_x3 = jax.random.split(key, 6)

    # ---- check 1: small shape, probe end-to-end ------------------------------
    N, C, W, H = 1, 4, 16, 16
    style = jax.random.normal(k_style, (N, C, W, H), dtype=jnp.float32)
    x = jax.random.normal(k_x, (N, C, W, H), dtype=jnp.float32)

    probe = StyleLossProbe(style)
    out = jax.block_until_ready(probe(x))
    loss = jax.block_until_ready(probe.loss)

    ref_loss = jnp.mean((_gram_ref(style) - _gram_ref(x)) ** 2)
    assert out.shape == x.shape
    assert jnp.allclose(out, x)
    assert jnp.allclose(loss, ref_loss, rtol=1e-5, atol=1e-6), (loss, ref_loss)

    # ---- check 2: force a multi-step reduction grid (WH = 512, TK = 128) ------
    N2, C2, W2, H2 = 1, 8, 16, 32
    style2 = jax.random.normal(k_style2, (N2, C2, W2, H2), dtype=jnp.float32)
    x2 = jax.random.normal(k_x2, (N2, C2, W2, H2), dtype=jnp.float32)
    flat_s2 = jnp.reshape(style2, (C2, W2 * H2))
    flat_x2 = jnp.reshape(x2, (C2, W2 * H2))
    sg2 = jax.block_until_ready(gram_matrix(flat_s2, tk=128))
    loss2 = jax.block_until_ready(style_mse_loss(sg2, flat_x2, tk=128))
    ref_loss2 = jnp.mean((_gram_ref(style2) - _gram_ref(x2)) ** 2)
    assert jnp.allclose(sg2, _gram_ref(style2), rtol=1e-5, atol=1e-6)
    assert jnp.allclose(loss2, ref_loss2, rtol=1e-5, atol=1e-6), (loss2, ref_loss2)

    # ---- check 3: WH not a multiple of 128 -> exact zero-padding path ---------
    N3, C3, W3, H3 = 1, 8, 10, 10  # WH = 100, padded up to the 128 lane multiple
    style3 = jax.random.normal(k_style3, (N3, C3, W3, H3), dtype=jnp.float32)
    x3 = jax.random.normal(k_x3, (N3, C3, W3, H3), dtype=jnp.float32)
    probe3 = StyleLossProbe(style3)
    jax.block_until_ready(probe3(x3))
    loss3 = jax.block_until_ready(probe3.loss)
    ref_loss3 = jnp.mean((_gram_ref(style3) - _gram_ref(x3)) ** 2)
    assert jnp.allclose(probe3.style_gram_matrix, _gram_ref(style3),
                        rtol=1e-5, atol=1e-6)
    assert jnp.allclose(loss3, ref_loss3, rtol=1e-5, atol=1e-6), (loss3, ref_loss3)

    # ---- check 4: native bf16 feed into the MXU (f32 accumulation) ------------
    loss_bf16 = jax.block_until_ready(
        style_mse_loss(sg2, flat_x2.astype(jnp.bfloat16), tk=128))
    assert bool(jnp.isfinite(loss_bf16))

    print("KERNEL_OK")
</pallas_src>

<mosaic_0001>
module attributes {stable_mosaic.version = 11 : i64} {
  func.func @_gram_partial_kernel(%arg0: i32, %arg1: i32, %arg2: memref<4x256xf32, #tpu.memory_space<vmem>>, %arg3: memref<1x4x4xf32, #tpu.memory_space<vmem>>) attributes {dimension_semantics = [#tpu.dimension_semantics<parallel>, #tpu.dimension_semantics<arbitrary>], iteration_bounds = array<i64: 1, 1>, scalar_prefetch = 0 : i64, scratch_operands = 0 : i64, tpu.core_type = #tpu.core_type<tc>, window_params = [{transform_indices = @transform_0, window_bounds = array<i64: 4, 256>}, {transform_indices = @transform_1, window_bounds = array<i64: 1, 4, 4>}]} {
    %c0_i32 = arith.constant 0 : i32
    %0 = arith.cmpi eq, %arg1, %c0_i32 : i32
    %1 = arith.extui %0 : i1 to i32
    %c0_i32_0 = arith.constant 0 : i32
    %2 = arith.cmpi ne, %1, %c0_i32_0 : i32
    scf.if %2 {
      %cst_10 = arith.constant 0.000000e+00 : f32
      %14 = vector.broadcast %cst_10 : f32 to vector<4x4xf32>
      %c0_11 = arith.constant 0 : index
      %c0_12 = arith.constant 0 : index
      %c0_13 = arith.constant 0 : index
      %15 = vector.load %arg3[%c0_11, %c0_12, %c0_13] : memref<1x4x4xf32, #tpu.memory_space<vmem>>, vector<1x4x4xf32>
      %16 = vector.shape_cast %15 : vector<1x4x4xf32> to vector<4x4xf32>
      %17 = vector.shape_cast %14 : vector<4x4xf32> to vector<1x4x4xf32>
      tpu.vector_store %arg3[%c0_11, %c0_12, %c0_13], %17 {strides = array<i32>} : memref<1x4x4xf32, #tpu.memory_space<vmem>>, vector<1x4x4xf32>,
    } else {
    }
    %c0 = arith.constant 0 : index
    %c0_1 = arith.constant 0 : index
    %c0_2 = arith.constant 0 : index
    %3 = vector.load %arg3[%c0, %c0_1, %c0_2] : memref<1x4x4xf32, #tpu.memory_space<vmem>>, vector<1x4x4xf32>
    %4 = vector.shape_cast %3 : vector<1x4x4xf32> to vector<4x4xf32>
    %c0_3 = arith.constant 0 : index
    %c0_4 = arith.constant 0 : index
    %5 = vector.load %arg2[%c0_3, %c0_4] : memref<4x256xf32, #tpu.memory_space<vmem>>, vector<4x256xf32>
    %cst = arith.constant dense<0.000000e+00> : vector<4x4xf32>
    %6 = tpu.matmul %5, %5, %cst {dimension_numbers = #tpu.dot_dimension_numbers<[1], [1], [0], [0], [0, 0, 1, 0], [], []>} : vector<4x256xf32>, vector<4x256xf32>, vector<4x4xf32> -> vector<4x4xf32>
    %7 = arith.addf %4, %6 : vector<4x4xf32>
    %c0_5 = arith.constant 0 : index
    %c0_6 = arith.constant 0 : index
    %c0_7 = arith.constant 0 : index
    %8 = vector.load %arg3[%c0_5, %c0_6, %c0_7] : memref<1x4x4xf32, #tpu.memory_space<vmem>>, vector<1x4x4xf32>
    %9 = vector.shape_cast %8 : vector<1x4x4xf32> to vector<4x4xf32>
    %10 = vector.shape_cast %7 : vector<4x4xf32> to vector<1x4x4xf32>
    tpu.vector_store %arg3[%c0_5, %c0_6, %c0_7], %10 {strides = array<i32>} : memref<1x4x4xf32, #tpu.memory_space<vmem>>, vector<1x4x4xf32>,
    %c0_i32_8 = arith.constant 0 : i32
    %11 = arith.cmpi eq, %arg1, %c0_i32_8 : i32
    %12 = arith.extui %11 : i1 to i32
    %c0_i32_9 = arith.constant 0 : i32
    %13 = arith.cmpi ne, %12, %c0_i32_9 : i32
    scf.if %13 {
      %c0_10 = arith.constant 0 : index
      %c0_11 = arith.constant 0 : index
      %c0_12 = arith.constant 0 : index
      %14 = vector.load %arg3[%c0_10, %c0_11, %c0_12] : memref<1x4x4xf32, #tpu.memory_space<vmem>>, vector<1x4x4xf32>
      %15 = vector.shape_cast %14 : vector<1x4x4xf32> to vector<4x4xf32>
      %cst_13 = arith.constant 9.765625E-4 : f32
      %16 = vector.broadcast %cst_13 : f32 to vector<4x4xf32>
      %17 = arith.mulf %15, %16 : vector<4x4xf32>
      %c0_14 = arith.constant 0 : index
      %c0_15 = arith.constant 0 : index
      %c0_16 = arith.constant 0 : index
      %18 = vector.load %arg3[%c0_14, %c0_15, %c0_16] : memref<1x4x4xf32, #tpu.memory_space<vmem>>, vector<1x4x4xf32>
      %19 = vector.shape_cast %18 : vector<1x4x4xf32> to vector<4x4xf32>
      %20 = vector.shape_cast %17 : vector<4x4xf32> to vector<1x4x4xf32>
      tpu.vector_store %arg3[%c0_14, %c0_15, %c0_16], %20 {strides = array<i32>} : memref<1x4x4xf32, #tpu.memory_space<vmem>>, vector<1x4x4xf32>,
    } else {
    }
    return
  }
  func.func @transform_0(%arg0: i32, %arg1: i32) -> (i32, i32) {
    %c1_i32 = arith.constant 1 : i32
    %0 = arith.muli %arg0, %c1_i32 : i32
    %1 = arith.addi %0, %arg1 : i32
    %c0_i32 = arith.constant 0 : i32
    %c0_i32_0 = arith.constant 0 : i32
    return %c0_i32, %1 : i32, i32
  }
  func.func @transform_1(%arg0: i32, %arg1: i32) -> (i32, i32, i32) {
    %c0_i32 = arith.constant 0 : i32
    %c0_i32_0 = arith.constant 0 : i32
    %c0_i32_1 = arith.constant 0 : i32
    return %arg0, %c0_i32, %c0_i32_0 : i32, i32, i32
  }
}

</mosaic_0001>

<llo_original>
// kernel: tpu_custom_call.1
$region0: #{tpu_custom_call.1}
  #allocation0 [shape = 'u32[]', space=smem, size = 0x4, offset = 0x4, fixed_abs, tag = 'smem constant byte address 0x4 - core index']
  #allocation1 [shape = 'u32[144,128]{1,0:T(1,128)}', space=vmem, size = 0x12000, scoped, tag = 'internal scratch']
  %s0 = inlined_call_operand.hbm [shape: f32[4,256], index: 0, kind: input, shape index: {}]
  %s1 = inlined_call_operand.hbm [shape: f32[1,4,4], index: 1, kind: output, shape index: {}]
  %s2 = sld [smem:[#allocation0]]
  $region26: #{tpu_custom_call.1} parent=0
    _
  %s4 = ssub.s32 1, %s2
  %s5 = scalar_select 0, %s4, %s2
  $region1: #{tpu_custom_call.1} parent=0
    #allocation2 [shape = 'u8[4096]{0}', space=vmem, size = 0x1000, scoped, tag = 'input window, operand 0, single buffered']
    #allocation3 [shape = 's32[1]{0}', space=sflag, size = 0x4, scoped, tag = 'scoped memory for tpu_custom_call.1']
    #allocation4 [shape = 's32[1]{0}', space=sflag, size = 0x4, scoped, tag = 'scoped memory for tpu_custom_call.1']
    #allocation5 [shape = 'u8[2048]{0}', space=vmem, size = 0x800, scoped, tag = 'output window, operand 0, single buffered']
    %6 = vsyncpa [#allocation3], 0
    %7 = vsyncpa [#allocation4], 0
    // Predicated region
    $region2: #{tpu_custom_call.1} parent=1 // pred_check
      _
    $region3: #{tpu_custom_call.1} parent=1 // pred_check_branch
      %9 = sbr.rel (0) target = $region5
    $region4: #{tpu_custom_call.1} parent=1 // pred_region
      %s10 = sadd.s32 0, 0
      %s11 = smul.u32 2, %s10
      %s13 = ssub.s32 128, 128
      %14 = vsyncadd [#allocation3], %s13
      %s15 = smul.addr %s11, 64
      %s16 = scalar_lea.hbm %s0, %s15
      %s18 = sshll.u32 [#allocation2], 4
      %s19 = int_to_ptr.vmem [resolvable:$true] %s18
      %21 = dma.hbm_to_vmem [thread:$0]  %s16, 128, %s19, [#allocation3]
    $region5: #{tpu_custom_call.1} parent=1 // pred_fallthru
      _
    // Predicated region
    $region6: #{tpu_custom_call.1} parent=1 // pred_check
      _
    $region7: #{tpu_custom_call.1} parent=1 // pred_check_branch
      %23 = sbr.rel (0) target = $region9
    $region8: #{tpu_custom_call.1} parent=1 // pred_region
      %24 = dma.done [#allocation3], 128
    $region9: #{tpu_custom_call.1} parent=1 // pred_fallthru
      _
    %s25 = sadd.s32 0, 0
    %s26 = smul.u32 2, %s25
    %p27 = scmp.eq.s32.totalorder 0, 0
    // Predicated region
    $region10: #{tpu_custom_call.1} parent=1 // pred_check
      %p28 = pneg %p27
    $region11: #{tpu_custom_call.1} parent=1 // pred_check_branch
      %30 = sbr.rel (%p28) target = $region13
    $region12: #{tpu_custom_call.1} parent=1 // pred_region
      %vm31 = vcmask 27648
      %32 = vst.msk [vmem:[#allocation5] sm:$0xf] %vm31, 0.0
    $region13: #{tpu_custom_call.1} parent=1 // pred_fallthru
      _
    %v33 = vld [vmem:[#allocation5] sm:$0xf]
    %v34 = vld [vmem:[#allocation2] sm:$0xff]
    %v36 = vcombine.high %v34, %v34
    %38 = vmatprep.subr.mxu0 %v36
    %39 = vmatpush1.xpose.msra.mxu0 %v34
    %40 = vmatprep.subr.mxu0 0.0
    %41 = vmatpush1.xpose.msra.mxu0 0.0
    %42 = vmatprep.subr.mxu0 0.0
    %43 = vmatpush1.xpose.msra.mxu0 0.0
    %44 = vmatprep.subr.mxu0 0.0
    %45 = vmatpush1.xpose.msra.mxu0 0.0
    %46 = vmatprep.subr.mxu0 0.0
    %47 = vmatpush1.xpose.msra.mxu0 0.0
    %48 = vmatprep.subr.mxu0 0.0
    %49 = vmatpush1.xpose.msra.mxu0 0.0
    %50 = vmatprep.subr.mxu0 0.0
    %51 = vmatpush1.xpose.msra.mxu0 0.0
    %52 = vmatprep.subr.mxu0 0.0
    %53 = vmatpush1.xpose.msra.mxu0 0.0
    %54 = vmatprep.subr.mxu0 0.0
    %55 = vmatpush1.xpose.msra.mxu0 0.0
    %56 = vmatprep.subr.mxu0 0.0
    %57 = vmatpush1.xpose.msra.mxu0 0.0
    %58 = vmatprep.subr.mxu0 0.0
    %59 = vmatpush1.xpose.msra.mxu0 0.0
    %60 = vmatprep.subr.mxu0 0.0
    %61 = vmatpush1.xpose.msra.mxu0 0.0
    %62 = vmatprep.subr.mxu0 0.0
    %63 = vmatpush1.xpose.msra.mxu0 0.0
    %64 = vmatprep.subr.mxu0 0.0
    %65 = vmatpush1.xpose.msra.mxu0 0.0
    %66 = vmatprep.subr.mxu0 0.0
    %67 = vmatpush1.xpose.msra.mxu0 0.0
    %68 = vmatprep.subr.mxu0 0.0
    %69 = vmatpush1.xpose.msra.mxu0 0.0
    %70 = vmatprep.subr.mxu0 0.0
    %71 = vmatpush1.xpose.msra.mxu0 0.0
    %72 = vmatprep.subr.mxu0 0.0
    %73 = vmatpush1.xpose.msra.mxu0 0.0
    %74 = vmatprep.subr.mxu0 0.0
    %75 = vmatpush1.xpose.msra.mxu0 0.0
    %76 = vmatprep.subr.mxu0 0.0
    %77 = vmatpush1.xpose.msra.mxu0 0.0
    %78 = vmatprep.subr.mxu0 0.0
    %79 = vmatpush1.xpose.msra.mxu0 0.0
    %80 = vmatprep.subr.mxu0 0.0
    %81 = vmatpush1.xpose.msra.mxu0 0.0
    %82 = vmatprep.subr.mxu0 0.0
    %83 = vmatpush1.xpose.msra.mxu0 0.0
    %84 = vmatprep.subr.mxu0 0.0
    %85 = vmatpush1.xpose.msra.mxu0 0.0
    %86 = vmatprep.subr.mxu0 0.0
    %87 = vmatpush1.xpose.msra.mxu0 0.0
    %88 = vmatprep.subr.mxu0 0.0
    %89 = vmatpush1.xpose.msra.mxu0 0.0
    %90 = vmatprep.subr.mxu0 0.0
    %91 = vmatpush1.xpose.msra.mxu0 0.0
    %92 = vmatprep.subr.mxu0 0.0
    %93 = vmatpush1.xpose.msra.mxu0 0.0
    %94 = vmatprep.subr.mxu0 0.0
    %95 = vmatpush1.xpose.msra.mxu0 0.0
    %96 = vmatprep.subr.mxu0 0.0
    %97 = vmatpush1.xpose.msra.mxu0 0.0
    %98 = vmatprep.subr.mxu0 0.0
    %99 = vmatpush1.xpose.msra.mxu0 0.0
    %100 = vmatprep.subr.mxu0 0.0
    %101 = vmatpush1.xpose.msra.mxu0 0.0
    %102 = vmatprep.mubr.f32.mxu0 %v36
    %103 = vmatmul.mubr.f32.gmra.mrb[0].mxu0 %v34
    %v104 = vpop.f32.mrb[0].mxu0
    %v105 = vadd.f32 0.0, %v104
    %v106 = vpop.f32.mrb[0].mxu0
    %107 = vdwg.mxu0
    %v108 = vadd.f32 %v33, %v105
    %vm109 = vcmask 27648
    %110 = vst.msk [vmem:[#allocation5] sm:$0xf] %vm109, %v108
    // Predicated region
    $region14: #{tpu_custom_call.1} parent=1 // pred_check
      %p111 = pneg %p27
    $region15: #{tpu_custom_call.1} parent=1 // pred_check_branch
      %113 = sbr.rel (%p111) target = $region17
    $region16: #{tpu_custom_call.1} parent=1 // pred_region
      %v114 = vld [vmem:[#allocation5] sm:$0xf]
      %v115 = vmul.f32 %v114, 0.0009765625
      %116 = vst.msk [vmem:[#allocation5] sm:$0xf] %vm109, %v115
    $region17: #{tpu_custom_call.1} parent=1 // pred_fallthru
      _
    // Predicated region
    $region18: #{tpu_custom_call.1} parent=1 // pred_check
      _
    $region19: #{tpu_custom_call.1} parent=1 // pred_check_branch
      %118 = sbr.rel (0) target = $region21
    $region20: #{tpu_custom_call.1} parent=1 // pred_region
      %s120 = ssub.s32 64, 64
      %121 = vsyncadd [#allocation4], %s120
      %s123 = sshll.u32 [#allocation5], 4
      %s124 = int_to_ptr.vmem [resolvable:$true] %s123
      %126 = dma.vmem_to_hbm [thread:$0]  %s124, 64, %s1, [#allocation4]
    $region21: #{tpu_custom_call.1} parent=1 // pred_fallthru
      _
    // Predicated region
    $region22: #{tpu_custom_call.1} parent=1 // pred_check
      _
    $region23: #{tpu_custom_call.1} parent=1 // pred_check_branch
      %128 = sbr.rel (0) target = $region25
    $region24: #{tpu_custom_call.1} parent=1 // pred_region
      %129 = dma.done [#allocation4], 64
    $region25: #{tpu_custom_call.1} parent=1 // pred_fallthru
      _
    %130 = vsyncpa [#allocation3], 1
    %131 = vsyncpa [#allocation4], 1

</llo_original>
